<compile_context>
chip_gen: v7x
topology: tpu7x:2x2x1
jax: 0.10.0
libtpu: 0.0.40
codegen_flags: <defaults>
</compile_context>

<pallas_src>
import jax
import jax.numpy as jnp
from jax.experimental import pallas as pl
from jax.experimental.pallas import tpu as pltpu

_LANES = 128          # padded feature width (real dims: 48 / 48 / 40 / 10)
_IN_FEAT = 64         # 1 * 8 * 8 (conv1 input, kept un-padded at K=64)
_OUT_DIM = 10

_MAX_MB = 2048        # max rows per grid step
_SINGLE_BLOCK_MAX = 256   # batches up to this stay on the grid-less path
_ROW_ALIGN = 16       # sublane alignment (bf16 output tile is (16,128))


def _round_up(x, m):
    return (x + m - 1) // m * m


def _cdiv(a, b):
    return -(-a // b)


# ----------------------------------------------------------------------------
# Fused forward kernel: 7 matmuls (bf16 operands, f32 accumulation) + biases +
# ReLUs + RK4 running-accumulator combine, all VMEM/vreg-resident.
# ----------------------------------------------------------------------------
def _fused_forward_kernel(x_ref, wc1_ref, bc1_ref, wode_ref, bode_ref,
                          wl1_ref, bl1_ref, wl2_ref, bl2_ref, o_ref):
    def dense(a_f32, w_ref, b_ref, relu):
        acc = jnp.dot(a_f32.astype(jnp.bfloat16), w_ref[...],
                      preferred_element_type=jnp.float32)
        acc = acc + b_ref[...]
        return jnp.maximum(acc, 0.0) if relu else acc

    # conv1 (as a (64,128) matrix) + ReLU; x block is (mb, 64) f32.
    h0 = dense(x_ref[...], wc1_ref, bc1_ref, True)

    # ODE block: RK4 (h = 1) with derivative f(z) = relu(conv3x3(z) + b),
    # conv as a matrix.  Weight loaded once, bias broadcast hoisted out of the
    # 4 stage evaluations (broadcast_in_dim is not CSE'd).
    wode = wode_ref[...]                                   # bf16 (128,128)
    bode = jnp.broadcast_to(bode_ref[...], h0.shape)       # f32 (mb,128)

    def ode_f(z_f32):
        a = jnp.dot(z_f32.astype(jnp.bfloat16), wode,
                    preferred_element_type=jnp.float32)
        return jnp.maximum(a + bode, 0.0)

    # Running accumulator: only h0, acc and the current stage stay live.
    k = ode_f(h0)                      # k1
    acc = k
    k = ode_f(h0 + 0.5 * k)            # k2
    acc = acc + 2.0 * k
    k = ode_f(h0 + 0.5 * k)            # k3
    acc = acc + 2.0 * k
    k = ode_f(h0 + k)                  # k4
    acc = acc + k
    h1 = h0 + (1.0 / 6.0) * acc

    # linear(48 -> 40) + ReLU, then linear2(40 -> 10); logits written as bf16.
    h2 = dense(h1, wl1_ref, bl1_ref, True)
    o_ref[...] = dense(h2, wl2_ref, bl2_ref, False).astype(o_ref.dtype)


def _choose_m_tiling(n):
    """Returns (padded_rows, row_block, num_blocks) with waste-free tiling."""
    mp = _round_up(max(n, 1), _ROW_ALIGN)
    if mp <= _SINGLE_BLOCK_MAX:
        return mp, mp, 1
    num_m = _cdiv(mp, _MAX_MB)
    if num_m == 1:
        num_m = 2            # always >=2 parallel steps -> both v7x TCs busy
    elif num_m % 2:
        num_m += 1           # balanced split across 2 TensorCores
    mb = _round_up(_cdiv(mp, num_m), _ROW_ALIGN)
    return num_m * mb, mb, num_m


def _fused_forward(xp, pp, *, mb, num_m):
    """xp: (Mp, 64) f32 activations; pp: dict of pre-padded bf16/f32 params."""
    mp, feat = xp.shape
    weights = (pp["wc1"], pp["bc1"], pp["wode"], pp["bode"],
               pp["wl1"], pp["bl1"], pp["wl2"], pp["bl2"])
    out_shape = jax.ShapeDtypeStruct((mp, _LANES), jnp.bfloat16)

    if num_m == 1:
        # Whole problem in one invocation, everything in VMEM; no grid.
        vmem = pl.BlockSpec(memory_space=pltpu.MemorySpace.VMEM)
        return pl.pallas_call(
            _fused_forward_kernel,
            out_shape=out_shape,
            in_specs=[vmem] * 9,
            out_specs=vmem,
        )(xp, *weights)

    # Tile the M axis, mark it "parallel" so multi-TensorCore chips split the
    # rows. Weights use constant index maps -> not re-fetched per grid step.
    x_spec = pl.BlockSpec((mb, feat), lambda i: (i, 0))        # K=64, un-padded
    out_spec = pl.BlockSpec((mb, _LANES), lambda i: (i, 0))
    wc1_spec = pl.BlockSpec((feat, _LANES), lambda i: (0, 0))
    w_spec = pl.BlockSpec((_LANES, _LANES), lambda i: (0, 0))
    b_spec = pl.BlockSpec((1, _LANES), lambda i: (0, 0))
    return pl.pallas_call(
        _fused_forward_kernel,
        out_shape=out_shape,
        grid=(num_m,),
        in_specs=[x_spec, wc1_spec, b_spec, w_spec, b_spec,
                  w_spec, b_spec, w_spec, b_spec],
        out_specs=out_spec,
        compiler_params=pltpu.CompilerParams(
            dimension_semantics=("parallel",),
            vmem_limit_bytes=32 * 1024 * 1024),
    )(xp, *weights)


# ----------------------------------------------------------------------------
# One-time parameter preparation (outside the jit hot path)
# ----------------------------------------------------------------------------
def _conv_to_matrix(weight, bias, in_chw, stride, padding):
    """Exact conv-as-matrix: conv(x)_flat == x_flat @ M + b (NCHW flatten order)."""
    c, h, w = in_chw
    eye = jnp.eye(c * h * w, dtype=jnp.float32).reshape(c * h * w, c, h, w)
    out = jax.lax.conv_general_dilated(
        eye, weight.astype(jnp.float32),
        window_strides=(stride, stride),
        padding=[(padding, padding), (padding, padding)],
        dimension_numbers=("NCHW", "OIHW", "NCHW"),
        precision=jax.lax.Precision.HIGHEST)
    co, oh, ow = out.shape[1:]
    mat = out.reshape(c * h * w, co * oh * ow)
    bvec = jnp.broadcast_to(bias.astype(jnp.float32)[:, None, None],
                            (co, oh, ow)).reshape(-1)
    return mat, bvec


def prepare_params(params):
    """Matricize convs, pad to lane-aligned tiles, cast weights to bf16 ONCE."""
    wc1, bc1 = _conv_to_matrix(params["conv1_w"], params["conv1_b"], (1, 8, 8), 2, 1)  # (64,48)
    wode, bode = _conv_to_matrix(params["ode_w"], params["ode_b"], (3, 4, 4), 1, 1)    # (48,48)
    wl1 = params["lin1_w"].T.astype(jnp.float32)   # (48,40)
    wl2 = params["lin2_w"].T.astype(jnp.float32)   # (40,10)

    def pad_w(w, rows=_LANES):
        full = jnp.zeros((rows, _LANES), jnp.float32).at[:w.shape[0], :w.shape[1]].set(w)
        return full.astype(jnp.bfloat16)            # bf16 MXU operand

    def pad_b(b):
        b = b.astype(jnp.float32)                    # biases stay f32 (f32 acc path)
        return jnp.zeros((1, _LANES), jnp.float32).at[0, :b.shape[0]].set(b)

    return {
        "wc1": pad_w(wc1, rows=_IN_FEAT), "bc1": pad_b(bc1),
        "wode": pad_w(wode), "bode": pad_b(bode),
        "wl1": pad_w(wl1), "bl1": pad_b(params["lin1_b"]),
        "wl2": pad_w(wl2), "bl2": pad_b(params["lin2_b"]),
    }


# ----------------------------------------------------------------------------
# Forward pass (mirrors ode_net.forward); per-call glue is one small row-pad
# of the (rows, 64) input and one slice of the logits.
# ----------------------------------------------------------------------------
def ode_net_forward(x_nchw, prepped):
    n = x_nchw.shape[0]
    feat = x_nchw.shape[1] * x_nchw.shape[2] * x_nchw.shape[3]   # 64
    mp, mb, num_m = _choose_m_tiling(n)
    x_flat = x_nchw.reshape(n, feat).astype(jnp.float32)         # PyTorch C*H*W order
    if mp != n:
        xp = jnp.zeros((mp, feat), jnp.float32).at[:n, :].set(x_flat)
    else:
        xp = x_flat
    out = _fused_forward(xp, prepped, mb=mb, num_m=num_m)
    return out[:n, :_OUT_DIM].astype(jnp.float32)


# ----------------------------------------------------------------------------
# Pure-JAX reference (for numerical validation only)
# ----------------------------------------------------------------------------
def reference_forward(x, params):
    def conv(z, w, b, stride, pad):
        y = jax.lax.conv_general_dilated(
            z, w, (stride, stride), [(pad, pad), (pad, pad)],
            dimension_numbers=("NCHW", "OIHW", "NCHW"),
            precision=jax.lax.Precision.HIGHEST)
        return y + b[None, :, None, None]

    h = jax.nn.relu(conv(x, params["conv1_w"], params["conv1_b"], 2, 1))

    def f(z):
        return jax.nn.relu(conv(z, params["ode_w"], params["ode_b"], 1, 1))

    k1 = f(h)
    k2 = f(h + 0.5 * k1)
    k3 = f(h + 0.5 * k2)
    k4 = f(h + k3)
    h = h + (1.0 / 6.0) * (k1 + 2.0 * k2 + 2.0 * k3 + k4)
    h = h.reshape(h.shape[0], -1)
    h = jax.nn.relu(h @ params["lin1_w"].T + params["lin1_b"])
    return h @ params["lin2_w"].T + params["lin2_b"]


def init_params(key):
    ks = jax.random.split(key, 8)

    def u(k, shape, fan_in):
        bound = 1.0 / float(fan_in) ** 0.5
        return jax.random.uniform(k, shape, jnp.float32, -bound, bound)

    return {
        "conv1_w": u(ks[0], (3, 1, 3, 3), 1 * 3 * 3),
        "conv1_b": u(ks[1], (3,), 1 * 3 * 3),
        "ode_w":   u(ks[2], (3, 3, 3, 3), 3 * 3 * 3),
        "ode_b":   u(ks[3], (3,), 3 * 3 * 3),
        "lin1_w":  u(ks[4], (40, 48), 48),   # PyTorch Linear layout (out, in)
        "lin1_b":  u(ks[5], (40,), 48),
        "lin2_w":  u(ks[6], (10, 40), 40),
        "lin2_b":  u(ks[7], (10,), 40),
    }


if __name__ == "__main__":
    key = jax.random.PRNGKey(0)
    k_param, k_x, k_x2 = jax.random.split(key, 3)
    params = init_params(k_param)
    prepped = prepare_params(params)          # one-time matricization / pad / bf16 cast

    forward = jax.jit(ode_net_forward)

    # Small batch implied by the module: conv1(1->3, s=2, p=1) on 8x8 -> 4x4 -> 48 feats.
    x = jax.random.normal(k_x, (2, 1, 8, 8), jnp.float32)
    out = jax.block_until_ready(forward(x, prepped))
    assert out.shape == (2, _OUT_DIM), out.shape
    err = float(jnp.max(jnp.abs(out - reference_forward(x, params))))
    assert err < 5e-2, f"small-batch max abs err {err}"

    # Larger batch: exercises the M-tiled 'parallel' grid path (>=2 steps, dual-TC).
    x_big = jax.random.normal(k_x2, (512, 1, 8, 8), jnp.float32)
    out_big = jax.block_until_ready(forward(x_big, prepped))
    assert out_big.shape == (512, _OUT_DIM), out_big.shape
    err_big = float(jnp.max(jnp.abs(out_big - reference_forward(x_big, params))))
    assert err_big < 5e-2, f"large-batch max abs err {err_big}"

    print("KERNEL_OK")
</pallas_src>

<mosaic_0001>
module attributes {stable_mosaic.version = 11 : i64} {
  func.func @_fused_forward_kernel(%arg0: memref<16x64xf32, #tpu.memory_space<vmem>>, %arg1: memref<64x128xbf16, #tpu.memory_space<vmem>>, %arg2: memref<1x128xf32, #tpu.memory_space<vmem>>, %arg3: memref<128x128xbf16, #tpu.memory_space<vmem>>, %arg4: memref<1x128xf32, #tpu.memory_space<vmem>>, %arg5: memref<128x128xbf16, #tpu.memory_space<vmem>>, %arg6: memref<1x128xf32, #tpu.memory_space<vmem>>, %arg7: memref<128x128xbf16, #tpu.memory_space<vmem>>, %arg8: memref<1x128xf32, #tpu.memory_space<vmem>>, %arg9: memref<16x128xbf16, #tpu.memory_space<vmem>>) attributes {dimension_semantics = [], scalar_prefetch = 0 : i64, scratch_operands = 0 : i64, tpu.core_type = #tpu.core_type<tc>} {
    %c0 = arith.constant 0 : index
    %c0_0 = arith.constant 0 : index
    %0 = vector.load %arg0[%c0, %c0_0] : memref<16x64xf32, #tpu.memory_space<vmem>>, vector<16x64xf32>
    %1 = arith.truncf %0 : vector<16x64xf32> to vector<16x64xbf16>
    %c0_1 = arith.constant 0 : index
    %c0_2 = arith.constant 0 : index
    %2 = vector.load %arg1[%c0_1, %c0_2] : memref<64x128xbf16, #tpu.memory_space<vmem>>, vector<64x128xbf16>
    %cst = arith.constant dense<0.000000e+00> : vector<16x128xf32>
    %3 = tpu.matmul %1, %2, %cst {dimension_numbers = #tpu.dot_dimension_numbers<[1], [0], [0], [1], [0, 0, 1, 1], [], []>} : vector<16x64xbf16>, vector<64x128xbf16>, vector<16x128xf32> -> vector<16x128xf32>
    %c0_3 = arith.constant 0 : index
    %c0_4 = arith.constant 0 : index
    %4 = vector.load %arg2[%c0_3, %c0_4] : memref<1x128xf32, #tpu.memory_space<vmem>>, vector<1x128xf32>
    %5 = vector.broadcast %4 : vector<1x128xf32> to vector<16x128xf32>
    %6 = arith.addf %3, %5 : vector<16x128xf32>
    %cst_5 = arith.constant 0.000000e+00 : f32
    %7 = vector.broadcast %cst_5 : f32 to vector<16x128xf32>
    %8 = arith.maximumf %6, %7 : vector<16x128xf32>
    %c0_6 = arith.constant 0 : index
    %c0_7 = arith.constant 0 : index
    %9 = vector.load %arg3[%c0_6, %c0_7] : memref<128x128xbf16, #tpu.memory_space<vmem>>, vector<128x128xbf16>
    %c0_8 = arith.constant 0 : index
    %c0_9 = arith.constant 0 : index
    %10 = vector.load %arg4[%c0_8, %c0_9] : memref<1x128xf32, #tpu.memory_space<vmem>>, vector<1x128xf32>
    %11 = vector.shape_cast %10 : vector<1x128xf32> to vector<1x128xf32>
    %12 = vector.broadcast %11 : vector<1x128xf32> to vector<16x128xf32>
    %13 = arith.truncf %8 : vector<16x128xf32> to vector<16x128xbf16>
    %cst_10 = arith.constant dense<0.000000e+00> : vector<16x128xf32>
    %14 = tpu.matmul %13, %9, %cst_10 {dimension_numbers = #tpu.dot_dimension_numbers<[1], [0], [0], [1], [0, 0, 1, 1], [], []>} : vector<16x128xbf16>, vector<128x128xbf16>, vector<16x128xf32> -> vector<16x128xf32>
    %15 = arith.addf %14, %12 : vector<16x128xf32>
    %cst_11 = arith.constant 0.000000e+00 : f32
    %16 = vector.broadcast %cst_11 : f32 to vector<16x128xf32>
    %17 = arith.maximumf %15, %16 : vector<16x128xf32>
    %cst_12 = arith.constant 5.000000e-01 : f32
    %18 = vector.broadcast %cst_12 : f32 to vector<16x128xf32>
    %19 = arith.mulf %18, %17 : vector<16x128xf32>
    %20 = arith.addf %8, %19 : vector<16x128xf32>
    %21 = arith.truncf %20 : vector<16x128xf32> to vector<16x128xbf16>
    %cst_13 = arith.constant dense<0.000000e+00> : vector<16x128xf32>
    %22 = tpu.matmul %21, %9, %cst_13 {dimension_numbers = #tpu.dot_dimension_numbers<[1], [0], [0], [1], [0, 0, 1, 1], [], []>} : vector<16x128xbf16>, vector<128x128xbf16>, vector<16x128xf32> -> vector<16x128xf32>
    %23 = arith.addf %22, %12 : vector<16x128xf32>
    %cst_14 = arith.constant 0.000000e+00 : f32
    %24 = vector.broadcast %cst_14 : f32 to vector<16x128xf32>
    %25 = arith.maximumf %23, %24 : vector<16x128xf32>
    %cst_15 = arith.constant 2.000000e+00 : f32
    %26 = vector.broadcast %cst_15 : f32 to vector<16x128xf32>
    %27 = arith.mulf %26, %25 : vector<16x128xf32>
    %28 = arith.addf %17, %27 : vector<16x128xf32>
    %cst_16 = arith.constant 5.000000e-01 : f32
    %29 = vector.broadcast %cst_16 : f32 to vector<16x128xf32>
    %30 = arith.mulf %29, %25 : vector<16x128xf32>
    %31 = arith.addf %8, %30 : vector<16x128xf32>
    %32 = arith.truncf %31 : vector<16x128xf32> to vector<16x128xbf16>
    %cst_17 = arith.constant dense<0.000000e+00> : vector<16x128xf32>
    %33 = tpu.matmul %32, %9, %cst_17 {dimension_numbers = #tpu.dot_dimension_numbers<[1], [0], [0], [1], [0, 0, 1, 1], [], []>} : vector<16x128xbf16>, vector<128x128xbf16>, vector<16x128xf32> -> vector<16x128xf32>
    %34 = arith.addf %33, %12 : vector<16x128xf32>
    %cst_18 = arith.constant 0.000000e+00 : f32
    %35 = vector.broadcast %cst_18 : f32 to vector<16x128xf32>
    %36 = arith.maximumf %34, %35 : vector<16x128xf32>
    %cst_19 = arith.constant 2.000000e+00 : f32
    %37 = vector.broadcast %cst_19 : f32 to vector<16x128xf32>
    %38 = arith.mulf %37, %36 : vector<16x128xf32>
    %39 = arith.addf %28, %38 : vector<16x128xf32>
    %40 = arith.addf %8, %36 : vector<16x128xf32>
    %41 = arith.truncf %40 : vector<16x128xf32> to vector<16x128xbf16>
    %cst_20 = arith.constant dense<0.000000e+00> : vector<16x128xf32>
    %42 = tpu.matmul %41, %9, %cst_20 {dimension_numbers = #tpu.dot_dimension_numbers<[1], [0], [0], [1], [0, 0, 1, 1], [], []>} : vector<16x128xbf16>, vector<128x128xbf16>, vector<16x128xf32> -> vector<16x128xf32>
    %43 = arith.addf %42, %12 : vector<16x128xf32>
    %cst_21 = arith.constant 0.000000e+00 : f32
    %44 = vector.broadcast %cst_21 : f32 to vector<16x128xf32>
    %45 = arith.maximumf %43, %44 : vector<16x128xf32>
    %46 = arith.addf %39, %45 : vector<16x128xf32>
    %cst_22 = arith.constant 0.166666672 : f32
    %47 = vector.broadcast %cst_22 : f32 to vector<16x128xf32>
    %48 = arith.mulf %47, %46 : vector<16x128xf32>
    %49 = arith.addf %8, %48 : vector<16x128xf32>
    %50 = arith.truncf %49 : vector<16x128xf32> to vector<16x128xbf16>
    %c0_23 = arith.constant 0 : index
    %c0_24 = arith.constant 0 : index
    %51 = vector.load %arg5[%c0_23, %c0_24] : memref<128x128xbf16, #tpu.memory_space<vmem>>, vector<128x128xbf16>
    %cst_25 = arith.constant dense<0.000000e+00> : vector<16x128xf32>
    %52 = tpu.matmul %50, %51, %cst_25 {dimension_numbers = #tpu.dot_dimension_numbers<[1], [0], [0], [1], [0, 0, 1, 1], [], []>} : vector<16x128xbf16>, vector<128x128xbf16>, vector<16x128xf32> -> vector<16x128xf32>
    %c0_26 = arith.constant 0 : index
    %c0_27 = arith.constant 0 : index
    %53 = vector.load %arg6[%c0_26, %c0_27] : memref<1x128xf32, #tpu.memory_space<vmem>>, vector<1x128xf32>
    %54 = vector.broadcast %53 : vector<1x128xf32> to vector<16x128xf32>
    %55 = arith.addf %52, %54 : vector<16x128xf32>
    %cst_28 = arith.constant 0.000000e+00 : f32
    %56 = vector.broadcast %cst_28 : f32 to vector<16x128xf32>
    %57 = arith.maximumf %55, %56 : vector<16x128xf32>
    %58 = arith.truncf %57 : vector<16x128xf32> to vector<16x128xbf16>
    %c0_29 = arith.constant 0 : index
    %c0_30 = arith.constant 0 : index
    %59 = vector.load %arg7[%c0_29, %c0_30] : memref<128x128xbf16, #tpu.memory_space<vmem>>, vector<128x128xbf16>
    %cst_31 = arith.constant dense<0.000000e+00> : vector<16x128xf32>
    %60 = tpu.matmul %58, %59, %cst_31 {dimension_numbers = #tpu.dot_dimension_numbers<[1], [0], [0], [1], [0, 0, 1, 1], [], []>} : vector<16x128xbf16>, vector<128x128xbf16>, vector<16x128xf32> -> vector<16x128xf32>
    %c0_32 = arith.constant 0 : index
    %c0_33 = arith.constant 0 : index
    %61 = vector.load %arg8[%c0_32, %c0_33] : memref<1x128xf32, #tpu.memory_space<vmem>>, vector<1x128xf32>
    %62 = vector.broadcast %61 : vector<1x128xf32> to vector<16x128xf32>
    %63 = arith.addf %60, %62 : vector<16x128xf32>
    %64 = arith.truncf %63 : vector<16x128xf32> to vector<16x128xbf16>
    %c0_34 = arith.constant 0 : index
    %c0_35 = arith.constant 0 : index
    %65 = vector.load %arg9[%c0_34, %c0_35] : memref<16x128xbf16, #tpu.memory_space<vmem>>, vector<16x128xbf16>
    tpu.vector_store %arg9[%c0_34, %c0_35], %64 {strides = array<i32>} : memref<16x128xbf16, #tpu.memory_space<vmem>>, vector<16x128xbf16>,
    return
  }
}

</mosaic_0001>

<llo_original>
// kernel: ode_net_forward.1
$region0: #{ode_net_forward.1}
  #allocation0 [shape = 'u32[]', space=smem, size = 0x4, offset = 0x4, fixed_abs, tag = 'smem constant byte address 0x4 - core index']
  #allocation1 [shape = 'u32[144,128]{1,0:T(1,128)}', space=vmem, size = 0x12000, scoped, tag = 'internal scratch']
  %s0 = inlined_call_operand.vmem [shape: f32[16,64], index: 0, kind: input, shape index: {}]
  %s1 = inlined_call_operand.hbm [shape: bf16[64,128], index: 1, kind: input, shape index: {}]
  %s2 = inlined_call_operand.vmem [shape: f32[1,128], index: 2, kind: input, shape index: {}]
  %s3 = inlined_call_operand.vmem [shape: bf16[128,128], index: 3, kind: input, shape index: {}]
  %s4 = inlined_call_operand.vmem [shape: f32[1,128], index: 4, kind: input, shape index: {}]
  %s5 = inlined_call_operand.hbm [shape: bf16[128,128], index: 5, kind: input, shape index: {}]
  %s6 = inlined_call_operand.vmem [shape: f32[1,128], index: 6, kind: input, shape index: {}]
  %s7 = inlined_call_operand.hbm [shape: bf16[128,128], index: 7, kind: input, shape index: {}]
  %s8 = inlined_call_operand.hbm [shape: f32[1,128], index: 8, kind: input, shape index: {}]
  %s9 = inlined_call_operand.vmem [shape: bf16[16,128], index: 9, kind: output, shape index: {}]
  %s10 = sld [smem:[#allocation0]]
  $region62: #{ode_net_forward.1} parent=0
    _
  %s12 = ssub.s32 1, %s10
  %s13 = scalar_select 0, %s12, %s10
  $region1: #{ode_net_forward.1} parent=0
    #allocation2 [shape = 'u8[16384]{0}', space=vmem, size = 0x4000, scoped, tag = 'input window, operand 1, single buffered']
    #allocation3 [shape = 's32[1]{0}', space=sflag, size = 0x4, scoped, tag = 'scoped memory for ode_net_forward.1']
    #allocation4 [shape = 'u8[32768]{0}', space=vmem, size = 0x8000, scoped, tag = 'input window, operand 5, single buffered']
    #allocation5 [shape = 's32[1]{0}', space=sflag, size = 0x4, scoped, tag = 'scoped memory for ode_net_forward.1']
    #allocation6 [shape = 'u8[32768]{0}', space=vmem, size = 0x8000, scoped, tag = 'input window, operand 7, single buffered']
    #allocation7 [shape = 'u8[512]{0}', space=vmem, size = 0x400, scoped, tag = 'input window, operand 8, single buffered']
    #allocation8 [shape = 's32[1]{0}', space=sflag, size = 0x4, scoped, tag = 'scoped memory for ode_net_forward.1']
    %14 = vsyncpa [#allocation3], 0
    %15 = vsyncpa [#allocation5], 0
    %16 = vsyncpa [#allocation8], 0
    // Predicated region
    $region2: #{ode_net_forward.1} parent=1 // pred_check
      _
    $region3: #{ode_net_forward.1} parent=1 // pred_check_branch
      %18 = sbr.rel (0) target = $region5
    $region4: #{ode_net_forward.1} parent=1 // pred_region
      _
    $region5: #{ode_net_forward.1} parent=1 // pred_fallthru
      _
    // Predicated region
    $region6: #{ode_net_forward.1} parent=1 // pred_check
      _
    $region7: #{ode_net_forward.1} parent=1 // pred_check_branch
      %20 = sbr.rel (0) target = $region9
    $region8: #{ode_net_forward.1} parent=1 // pred_region
      %s22 = ssub.s32 512, 512
      %23 = vsyncadd [#allocation3], %s22
      %s24 = sshll.u32 [#allocation2], 4
      %s25 = int_to_ptr.vmem [resolvable:$true] %s24
      %30 = dma.hbm_to_vmem [thread:$0]  %s1, 512, %s25, [#allocation3], 64, 64, 4
    $region9: #{ode_net_forward.1} parent=1 // pred_fallthru
      _
    // Predicated region
    $region10: #{ode_net_forward.1} parent=1 // pred_check
      _
    $region11: #{ode_net_forward.1} parent=1 // pred_check_branch
      %32 = sbr.rel (0) target = $region13
    $region12: #{ode_net_forward.1} parent=1 // pred_region
      _
    $region13: #{ode_net_forward.1} parent=1 // pred_fallthru
      _
    // Predicated region
    $region14: #{ode_net_forward.1} parent=1 // pred_check
      _
    $region15: #{ode_net_forward.1} parent=1 // pred_check_branch
      %34 = sbr.rel (0) target = $region17
    $region16: #{ode_net_forward.1} parent=1 // pred_region
      _
    $region17: #{ode_net_forward.1} parent=1 // pred_fallthru
      _
    // Predicated region
    $region18: #{ode_net_forward.1} parent=1 // pred_check
      _
    $region19: #{ode_net_forward.1} parent=1 // pred_check_branch
      %36 = sbr.rel (0) target = $region21
    $region20: #{ode_net_forward.1} parent=1 // pred_region
      _
    $region21: #{ode_net_forward.1} parent=1 // pred_fallthru
      _
    // Predicated region
    $region22: #{ode_net_forward.1} parent=1 // pred_check
      _
    $region23: #{ode_net_forward.1} parent=1 // pred_check_branch
      %38 = sbr.rel (0) target = $region25
    $region24: #{ode_net_forward.1} parent=1 // pred_region
      %s40 = ssub.s32 1024, 1024
      %41 = vsyncadd [#allocation5], %s40
      %s42 = sshll.u32 [#allocation4], 4
      %s43 = int_to_ptr.vmem [resolvable:$true] %s42
      %48 = dma.hbm_to_vmem [thread:$0]  %s5, 1024, %s43, [#allocation5], 64, 64, 4
    $region25: #{ode_net_forward.1} parent=1 // pred_fallthru
      _
    // Predicated region
    $region26: #{ode_net_forward.1} parent=1 // pred_check
      _
    $region27: #{ode_net_forward.1} parent=1 // pred_check_branch
      %50 = sbr.rel (0) target = $region29
    $region28: #{ode_net_forward.1} parent=1 // pred_region
      _
    $region29: #{ode_net_forward.1} parent=1 // pred_fallthru
      _
    // Predicated region
    $region30: #{ode_net_forward.1} parent=1 // pred_check
      _
    $region31: #{ode_net_forward.1} parent=1 // pred_check_branch
      %52 = sbr.rel (0) target = $region33
    $region32: #{ode_net_forward.1} parent=1 // pred_region
      %s54 = ssub.s32 1024, 1024
      %55 = vsyncadd [#allocation5], %s54
      %s56 = sshll.u32 [#allocation6], 4
      %s57 = int_to_ptr.vmem [resolvable:$true] %s56
      %62 = dma.hbm_to_vmem [thread:$0]  %s7, 1024, %s57, [#allocation5], 64, 64, 4
    $region33: #{ode_net_forward.1} parent=1 // pred_fallthru
      _
    // Predicated region
    $region34: #{ode_net_forward.1} parent=1 // pred_check
      _
    $region35: #{ode_net_forward.1} parent=1 // pred_check_branch
      %64 = sbr.rel (0) target = $region37
    $region36: #{ode_net_forward.1} parent=1 // pred_region
      %s66 = ssub.s32 16, 16
      %67 = vsyncadd [#allocation8], %s66
      %s69 = sshll.u32 [#allocation7], 4
      %s70 = int_to_ptr.vmem [resolvable:$true] %s69
      %72 = dma.hbm_to_vmem [thread:$0]  %s8, 16, %s70, [#allocation8]
    $region37: #{ode_net_forward.1} parent=1 // pred_fallthru
      _
    // Predicated region
    $region38: #{ode_net_forward.1} parent=1 // pred_check
      _
    $region39: #{ode_net_forward.1} parent=1 // pred_check_branch
      %74 = sbr.rel (0) target = $region41
    $region40: #{ode_net_forward.1} parent=1 // pred_region
      %75 = dma.done [#allocation3], 512
    $region41: #{ode_net_forward.1} parent=1 // pred_fallthru
      _
    // Predicated region
    $region42: #{ode_net_forward.1} parent=1 // pred_check
      _
    $region43: #{ode_net_forward.1} parent=1 // pred_check_branch
      %77 = sbr.rel (0) target = $region45
    $region44: #{ode_net_forward.1} parent=1 // pred_region
      %78 = dma.done [#allocation5], 1024
    $region45: #{ode_net_forward.1} parent=1 // pred_fallthru
      _
    // Predicated region
    $region46: #{ode_net_forward.1} parent=1 // pred_check
      _
    $region47: #{ode_net_forward.1} parent=1 // pred_check_branch
      %80 = sbr.rel (0) target = $region49
    $region48: #{ode_net_forward.1} parent=1 // pred_region
      %81 = dma.done [#allocation5], 1024
    $region49: #{ode_net_forward.1} parent=1 // pred_fallthru
      _
    // Predicated region
    $region50: #{ode_net_forward.1} parent=1 // pred_check
      _
    $region51: #{ode_net_forward.1} parent=1 // pred_check_branch
      %83 = sbr.rel (0) target = $region53
    $region52: #{ode_net_forward.1} parent=1 // pred_region
      %84 = dma.done [#allocation8], 16
    $region53: #{ode_net_forward.1} parent=1 // pred_fallthru
      _
    %v86 = vld [vmem:[%s0] sm:$0xff]
    %v87 = vld [vmem:[%s0 + $0x8] sm:$0xff]
    %v88 = vpack.c.bf16 %v87, %v86
    %v89 = vld [vmem:[#allocation2] sm:$0xf]
    %v90 = vld [vmem:[#allocation2 + $0x4] sm:$0xf]
    %v91 = vld [vmem:[#allocation2 + $0x8] sm:$0xf]
    %v92 = vld [vmem:[#allocation2 + $0xc] sm:$0xf]
    %v93 = vld [vmem:[#allocation2 + $0x10] sm:$0xf]
    %v94 = vld [vmem:[#allocation2 + $0x14] sm:$0xf]
    %v95 = vld [vmem:[#allocation2 + $0x18] sm:$0xf]
    %v96 = vld [vmem:[#allocation2 + $0x1c] sm:$0xf]
    %v97 = vld [vmem:[%s2] sm:$0x1]
    %v99 = vlaneseq
    %v100 = vshrl.u32 %v99, 7
    %v101 = vsub.s32 0, %v100
    %v102 = vrot.slane %v97, %v101
    %v112 = vunpack.c.l.b16 %v89
    %v113 = vunpack.c.l.b16 %v90
    %v114 = vunpack.c.l.b16 %v91
    %v115 = vunpack.c.l.b16 %v92
    %v116 = vunpack.c.l.b16 %v93
    %v117 = vunpack.c.l.b16 %v94
    %v118 = vunpack.c.l.b16 %v95
    %v119 = vunpack.c.l.b16 %v96
    %v120 = vpack.c.b16 %v113, %v112
    %v121 = vpack.c.b16 %v115, %v114
    %v122 = vpack.c.b16 %v117, %v116
    %v123 = vpack.c.b16 %v119, %v118
    %vm128 = vcmask 523264
    %v130 = vsel %vm128, %v88, 0
    %132 = vmatprep.subr.bf16.mxu0 0
    %133 = vmatpush1.bf16.msra.mxu0 %v120
    %134 = vmatprep.subr.bf16.mxu0 0
    %135 = vmatpush1.bf16.msra.mxu0 %v121
    %136 = vmatprep.subr.bf16.mxu0 0
    %137 = vmatpush1.bf16.msra.mxu0 %v122
    %138 = vmatprep.subr.bf16.mxu0 0
    %139 = vmatpush1.bf16.msra.mxu0 %v123
    %140 = vmatprep.subr.bf16.mxu0 0
    %141 = vmatpush1.bf16.msra.mxu0 0
    %142 = vmatprep.subr.bf16.mxu0 0
    %143 = vmatpush1.bf16.msra.mxu0 0
    %144 = vmatprep.subr.bf16.mxu0 0
    %145 = vmatpush1.bf16.msra.mxu0 0
    %146 = vmatprep.subr.bf16.mxu0 0
    %147 = vmatpush1.bf16.msra.mxu0 0
    %148 = vmatprep.subr.bf16.mxu0 0
    %149 = vmatpush1.bf16.msra.mxu0 0
    %150 = vmatprep.subr.bf16.mxu0 0
    %151 = vmatpush1.bf16.msra.mxu0 0
    %152 = vmatprep.subr.bf16.mxu0 0
    %153 = vmatpush1.bf16.msra.mxu0 0
    %154 = vmatprep.subr.bf16.mxu0 0
    %155 = vmatpush1.bf16.msra.mxu0 0
    %156 = vmatprep.subr.bf16.mxu0 0
    %157 = vmatpush1.bf16.msra.mxu0 0
    %158 = vmatprep.subr.bf16.mxu0 0
    %159 = vmatpush1.bf16.msra.mxu0 0
    %160 = vmatprep.subr.bf16.mxu0 0
    %161 = vmatpush1.bf16.msra.mxu0 0
    %162 = vmatprep.subr.bf16.mxu0 0
    %163 = vmatpush1.bf16.msra.mxu0 0
    %164 = vmatprep.mubr.bf16.mxu0 0
    %165 = vmatmul.mubr.bf16.gmra.mrb[0].mxu0 %v130
    %v166 = vpop.f32.mrb[0].mxu0
    %v167 = vadd.f32 %v102, %v166
    %v168 = vpop.f32.mrb[0].mxu0
    %v169 = vpop.f32.mrb[0].mxu0
    %v170 = vadd.f32 %v102, %v169
    %v171 = vpop.f32.mrb[0].mxu0
    %172 = vdwg.mxu0
    %v173 = vmax.f32 %v167, 0.0
    %v174 = vmax.f32 %v170, 0.0
    %v175 = vld [vmem:[%s3] sm:$0xf]
    %v176 = vld [vmem:[%s3 + $0x4] sm:$0xf]
    %v177 = vld [vmem:[%s3 + $0x8] sm:$0xf]
    %v178 = vld [vmem:[%s3 + $0xc] sm:$0xf]
    %v179 = vld [vmem:[%s3 + $0x10] sm:$0xf]
    %v180 = vld [vmem:[%s3 + $0x14] sm:$0xf]
    %v181 = vld [vmem:[%s3 + $0x18] sm:$0xf]
    %v182 = vld [vmem:[%s3 + $0x1c] sm:$0xf]
    %v183 = vld [vmem:[%s3 + $0x20] sm:$0xf]
    %v184 = vld [vmem:[%s3 + $0x24] sm:$0xf]
    %v185 = vld [vmem:[%s3 + $0x28] sm:$0xf]
    %v186 = vld [vmem:[%s3 + $0x2c] sm:$0xf]
    %v187 = vld [vmem:[%s3 + $0x30] sm:$0xf]
    %v188 = vld [vmem:[%s3 + $0x34] sm:$0xf]
    %v189 = vld [vmem:[%s3 + $0x38] sm:$0xf]
    %v190 = vld [vmem:[%s3 + $0x3c] sm:$0xf]
    %v191 = vld [vmem:[%s4] sm:$0x1]
    %v193 = vlaneseq
    %v194 = vshrl.u32 %v193, 7
    %v195 = vsub.s32 0, %v194
    %v196 = vrot.slane %v191, %v195
    %v198 = vpack.c.bf16 %v174, %v173
    %v215 = vunpack.c.l.b16 %v175
    %v216 = vunpack.c.l.b16 %v176
    %v217 = vunpack.c.l.b16 %v177
    %v218 = vunpack.c.l.b16 %v178
    %v219 = vunpack.c.l.b16 %v179
    %v220 = vunpack.c.l.b16 %v180
    %v221 = vunpack.c.l.b16 %v181
    %v222 = vunpack.c.l.b16 %v182
    %v223 = vunpack.c.l.b16 %v183
    %v224 = vunpack.c.l.b16 %v184
    %v225 = vunpack.c.l.b16 %v185
    %v226 = vunpack.c.l.b16 %v186
    %v227 = vunpack.c.l.b16 %v187
    %v228 = vunpack.c.l.b16 %v188
    %v229 = vunpack.c.l.b16 %v189
    %v230 = vunpack.c.l.b16 %v190
    %v231 = vpack.c.b16 %v216, %v215
    %v232 = vpack.c.b16 %v218, %v217
    %v233 = vpack.c.b16 %v220, %v219
    %v234 = vpack.c.b16 %v222, %v221
    %v235 = vpack.c.b16 %v224, %v223
    %v236 = vpack.c.b16 %v226, %v225
    %v237 = vpack.c.b16 %v228, %v227
    %v238 = vpack.c.b16 %v230, %v229
    %247 = vmatprep.subr.bf16.mxu0 0
    %248 = vmatpush1.bf16.msra.mxu0 %v231
    %249 = vmatprep.subr.bf16.mxu0 0
    %250 = vmatpush1.bf16.msra.mxu0 %v232
    %251 = vmatprep.subr.bf16.mxu0 0
    %252 = vmatpush1.bf16.msra.mxu0 %v233
    %253 = vmatprep.subr.bf16.mxu0 0
    %254 = vmatpush1.bf16.msra.mxu0 %v234
    %255 = vmatprep.subr.bf16.mxu0 0
    %256 = vmatpush1.bf16.msra.mxu0 %v235
    %257 = vmatprep.subr.bf16.mxu0 0
    %258 = vmatpush1.bf16.msra.mxu0 %v236
    %259 = vmatprep.subr.bf16.mxu0 0
    %260 = vmatpush1.bf16.msra.mxu0 %v237
    %261 = vmatprep.subr.bf16.mxu0 0
    %262 = vmatpush1.bf16.msra.mxu0 %v238
    %263 = vmatprep.subr.bf16.mxu0 0
    %264 = vmatpush1.bf16.msra.mxu0 0
    %265 = vmatprep.subr.bf16.mxu0 0
    %266 = vmatpush1.bf16.msra.mxu0 0
    %267 = vmatprep.subr.bf16.mxu0 0
    %268 = vmatpush1.bf16.msra.mxu0 0
    %269 = vmatprep.subr.bf16.mxu0 0
    %270 = vmatpush1.bf16.msra.mxu0 0
    %271 = vmatprep.subr.bf16.mxu0 0
    %272 = vmatpush1.bf16.msra.mxu0 0
    %273 = vmatprep.subr.bf16.mxu0 0
    %274 = vmatpush1.bf16.msra.mxu0 0
    %275 = vmatprep.subr.bf16.mxu0 0
    %276 = vmatpush1.bf16.msra.mxu0 0
    %277 = vmatprep.subr.bf16.mxu0 0
    %278 = vmatpush1.bf16.msra.mxu0 0
    %279 = vmatprep.mubr.bf16.mxu0 0
    %280 = vmatmul.mubr.bf16.gmra.mrb[0].mxu0 %v198
    %v281 = vpop.f32.mrb[0].mxu0
    %v282 = vadd.f32 %v196, %v281
    %v283 = vpop.f32.mrb[0].mxu0
    %v284 = vpop.f32.mrb[0].mxu0
    %v285 = vadd.f32 %v196, %v284
    %v286 = vpop.f32.mrb[0].mxu0
    %287 = vdwg.mxu0
    %v288 = vmax.f32 %v282, 0.0
    %v289 = vmax.f32 %v285, 0.0
    %v290 = vmul.f32 %v288, 0.5
    %v291 = vmul.f32 %v289, 0.5
    %v292 = vadd.f32 %v173, %v290
    %v293 = vadd.f32 %v174, %v291
    %v294 = vpack.c.bf16 %v293, %v292
    %295 = vmatprep.subr.bf16.mxu0 0
    %296 = vmatpush1.bf16.msra.mxu0 %v231
    %297 = vmatprep.subr.bf16.mxu0 0
    %298 = vmatpush1.bf16.msra.mxu0 %v232
    %299 = vmatprep.subr.bf16.mxu0 0
    %300 = vmatpush1.bf16.msra.mxu0 %v233
    %301 = vmatprep.subr.bf16.mxu0 0
    %302 = vmatpush1.bf16.msra.mxu0 %v234
    %303 = vmatprep.subr.bf16.mxu0 0
    %304 = vmatpush1.bf16.msra.mxu0 %v235
    %305 = vmatprep.subr.bf16.mxu0 0
    %306 = vmatpush1.bf16.msra.mxu0 %v236
    %307 = vmatprep.subr.bf16.mxu0 0
    %308 = vmatpush1.bf16.msra.mxu0 %v237
    %309 = vmatprep.subr.bf16.mxu0 0
    %310 = vmatpush1.bf16.msra.mxu0 %v238
    %311 = vmatprep.subr.bf16.mxu0 0
    %312 = vmatpush1.bf16.msra.mxu0 0
    %313 = vmatprep.subr.bf16.mxu0 0
    %314 = vmatpush1.bf16.msra.mxu0 0
    %315 = vmatprep.subr.bf16.mxu0 0
    %316 = vmatpush1.bf16.msra.mxu0 0
    %317 = vmatprep.subr.bf16.mxu0 0
    %318 = vmatpush1.bf16.msra.mxu0 0
    %319 = vmatprep.subr.bf16.mxu0 0
    %320 = vmatpush1.bf16.msra.mxu0 0
    %321 = vmatprep.subr.bf16.mxu0 0
    %322 = vmatpush1.bf16.msra.mxu0 0
    %323 = vmatprep.subr.bf16.mxu0 0
    %324 = vmatpush1.bf16.msra.mxu0 0
    %325 = vmatprep.subr.bf16.mxu0 0
    %326 = vmatpush1.bf16.msra.mxu0 0
    %327 = vmatprep.mubr.bf16.mxu0 0
    %328 = vmatmul.mubr.bf16.gmra.mrb[0].mxu0 %v294
    %v329 = vpop.f32.mrb[0].mxu0
    %v330 = vadd.f32 %v196, %v329
    %v331 = vpop.f32.mrb[0].mxu0
    %v332 = vpop.f32.mrb[0].mxu0
    %v333 = vadd.f32 %v196, %v332
    %v334 = vpop.f32.mrb[0].mxu0
    %335 = vdwg.mxu0
    %v336 = vmax.f32 %v330, 0.0
    %v337 = vmax.f32 %v333, 0.0
    %v338 = vmul.f32 %v336, 2.0
    %v339 = vmul.f32 %v337, 2.0
    %v340 = vadd.f32 %v288, %v338
    %v341 = vadd.f32 %v289, %v339
    %v342 = vmul.f32 %v336, 0.5
    %v343 = vmul.f32 %v337, 0.5
    %v344 = vadd.f32 %v173, %v342
    %v345 = vadd.f32 %v174, %v343
    %v346 = vpack.c.bf16 %v345, %v344
    %347 = vmatprep.subr.bf16.mxu0 0
    %348 = vmatpush1.bf16.msra.mxu0 %v231
    %349 = vmatprep.subr.bf16.mxu0 0
    %350 = vmatpush1.bf16.msra.mxu0 %v232
    %351 = vmatprep.subr.bf16.mxu0 0
    %352 = vmatpush1.bf16.msra.mxu0 %v233
    %353 = vmatprep.subr.bf16.mxu0 0
    %354 = vmatpush1.bf16.msra.mxu0 %v234
    %355 = vmatprep.subr.bf16.mxu0 0
    %356 = vmatpush1.bf16.msra.mxu0 %v235
    %357 = vmatprep.subr.bf16.mxu0 0
    %358 = vmatpush1.bf16.msra.mxu0 %v236
    %359 = vmatprep.subr.bf16.mxu0 0
    %360 = vmatpush1.bf16.msra.mxu0 %v237
    %361 = vmatprep.subr.bf16.mxu0 0
    %362 = vmatpush1.bf16.msra.mxu0 %v238
    %363 = vmatprep.subr.bf16.mxu0 0
    %364 = vmatpush1.bf16.msra.mxu0 0
    %365 = vmatprep.subr.bf16.mxu0 0
    %366 = vmatpush1.bf16.msra.mxu0 0
    %367 = vmatprep.subr.bf16.mxu0 0
    %368 = vmatpush1.bf16.msra.mxu0 0
    %369 = vmatprep.subr.bf16.mxu0 0
    %370 = vmatpush1.bf16.msra.mxu0 0
    %371 = vmatprep.subr.bf16.mxu0 0
    %372 = vmatpush1.bf16.msra.mxu0 0
    %373 = vmatprep.subr.bf16.mxu0 0
    %374 = vmatpush1.bf16.msra.mxu0 0
    %375 = vmatprep.subr.bf16.mxu0 0
    %376 = vmatpush1.bf16.msra.mxu0 0
    %377 = vmatprep.subr.bf16.mxu0 0
    %378 = vmatpush1.bf16.msra.mxu0 0
    %379 = vmatprep.mubr.bf16.mxu0 0
    %380 = vmatmul.mubr.bf16.gmra.mrb[0].mxu0 %v346
    %v381 = vpop.f32.mrb[0].mxu0
    %v382 = vadd.f32 %v196, %v381
    %v383 = vpop.f32.mrb[0].mxu0
    %v384 = vpop.f32.mrb[0].mxu0
    %v385 = vadd.f32 %v196, %v384
    %v386 = vpop.f32.mrb[0].mxu0
    %387 = vdwg.mxu0
    %v388 = vmax.f32 %v382, 0.0
    %v389 = vmax.f32 %v385, 0.0
    %v390 = vmul.f32 %v388, 2.0
    %v391 = vmul.f32 %v389, 2.0
    %v392 = vadd.f32 %v340, %v390
    %v393 = vadd.f32 %v341, %v391
    %v394 = vadd.f32 %v173, %v388
    %v395 = vadd.f32 %v174, %v389
    %v396 = vpack.c.bf16 %v395, %v394
    %397 = vmatprep.subr.bf16.mxu0 0
    %398 = vmatpush1.bf16.msra.mxu0 %v231
    %399 = vmatprep.subr.bf16.mxu0 0
    %400 = vmatpush1.bf16.msra.mxu0 %v232
    %401 = vmatprep.subr.bf16.mxu0 0
    %402 = vmatpush1.bf16.msra.mxu0 %v233
    %403 = vmatprep.subr.bf16.mxu0 0
    %404 = vmatpush1.bf16.msra.mxu0 %v234
    %405 = vmatprep.subr.bf16.mxu0 0
    %406 = vmatpush1.bf16.msra.mxu0 %v235
    %407 = vmatprep.subr.bf16.mxu0 0
    %408 = vmatpush1.bf16.msra.mxu0 %v236
    %409 = vmatprep.subr.bf16.mxu0 0
    %410 = vmatpush1.bf16.msra.mxu0 %v237
    %411 = vmatprep.subr.bf16.mxu0 0
    %412 = vmatpush1.bf16.msra.mxu0 %v238
    %413 = vmatprep.subr.bf16.mxu0 0
    %414 = vmatpush1.bf16.msra.mxu0 0
    %415 = vmatprep.subr.bf16.mxu0 0
    %416 = vmatpush1.bf16.msra.mxu0 0
    %417 = vmatprep.subr.bf16.mxu0 0
    %418 = vmatpush1.bf16.msra.mxu0 0
    %419 = vmatprep.subr.bf16.mxu0 0
    %420 = vmatpush1.bf16.msra.mxu0 0
    %421 = vmatprep.subr.bf16.mxu0 0
    %422 = vmatpush1.bf16.msra.mxu0 0
    %423 = vmatprep.subr.bf16.mxu0 0
    %424 = vmatpush1.bf16.msra.mxu0 0
    %425 = vmatprep.subr.bf16.mxu0 0
    %426 = vmatpush1.bf16.msra.mxu0 0
    %427 = vmatprep.subr.bf16.mxu0 0
    %428 = vmatpush1.bf16.msra.mxu0 0
    %429 = vmatprep.mubr.bf16.mxu0 0
    %430 = vmatmul.mubr.bf16.gmra.mrb[0].mxu0 %v396
    %v431 = vpop.f32.mrb[0].mxu0
    %v432 = vadd.f32 %v196, %v431
    %v433 = vpop.f32.mrb[0].mxu0
    %v434 = vpop.f32.mrb[0].mxu0
    %v435 = vadd.f32 %v196, %v434
    %v436 = vpop.f32.mrb[0].mxu0
    %437 = vdwg.mxu0
    %v438 = vmax.f32 %v432, 0.0
    %v439 = vmax.f32 %v435, 0.0
    %v440 = vadd.f32 %v392, %v438
    %v441 = vadd.f32 %v393, %v439
    %v442 = vmul.f32 %v440, 0.16666667
    %v443 = vmul.f32 %v441, 0.16666667
    %v444 = vadd.f32 %v173, %v442
    %v445 = vadd.f32 %v174, %v443
    %v446 = vpack.c.bf16 %v445, %v444
    %v447 = vld [vmem:[#allocation4] sm:$0xf]
    %v448 = vld [vmem:[#allocation4 + $0x4] sm:$0xf]
    %v449 = vld [vmem:[#allocation4 + $0x8] sm:$0xf]
    %v450 = vld [vmem:[#allocation4 + $0xc] sm:$0xf]
    %v451 = vld [vmem:[#allocation4 + $0x10] sm:$0xf]
    %v452 = vld [vmem:[#allocation4 + $0x14] sm:$0xf]
    %v453 = vld [vmem:[#allocation4 + $0x18] sm:$0xf]
    %v454 = vld [vmem:[#allocation4 + $0x1c] sm:$0xf]
    %v455 = vld [vmem:[#allocation4 + $0x20] sm:$0xf]
    %v456 = vld [vmem:[#allocation4 + $0x24] sm:$0xf]
    %v457 = vld [vmem:[#allocation4 + $0x28] sm:$0xf]
    %v458 = vld [vmem:[#allocation4 + $0x2c] sm:$0xf]
    %v459 = vld [vmem:[#allocation4 + $0x30] sm:$0xf]
    %v460 = vld [vmem:[#allocation4 + $0x34] sm:$0xf]
    %v461 = vld [vmem:[#allocation4 + $0x38] sm:$0xf]
    %v462 = vld [vmem:[#allocation4 + $0x3c] sm:$0xf]
    %v463 = vld [vmem:[%s6] sm:$0x1]
    %v465 = vlaneseq
    %v466 = vshrl.u32 %v465, 7
    %v467 = vsub.s32 0, %v466
    %v468 = vrot.slane %v463, %v467
    %v486 = vunpack.c.l.b16 %v447
    %v487 = vunpack.c.l.b16 %v448
    %v488 = vunpack.c.l.b16 %v449
    %v489 = vunpack.c.l.b16 %v450
    %v490 = vunpack.c.l.b16 %v451
    %v491 = vunpack.c.l.b16 %v452
    %v492 = vunpack.c.l.b16 %v453
    %v493 = vunpack.c.l.b16 %v454
    %v494 = vunpack.c.l.b16 %v455
    %v495 = vunpack.c.l.b16 %v456
    %v496 = vunpack.c.l.b16 %v457
    %v497 = vunpack.c.l.b16 %v458
    %v498 = vunpack.c.l.b16 %v459
    %v499 = vunpack.c.l.b16 %v460
    %v500 = vunpack.c.l.b16 %v461
    %v501 = vunpack.c.l.b16 %v462
    %v502 = vpack.c.b16 %v487, %v486
    %v503 = vpack.c.b16 %v489, %v488
    %v504 = vpack.c.b16 %v491, %v490
    %v505 = vpack.c.b16 %v493, %v492
    %v506 = vpack.c.b16 %v495, %v494
    %v507 = vpack.c.b16 %v497, %v496
    %v508 = vpack.c.b16 %v499, %v498
    %v509 = vpack.c.b16 %v501, %v500
    %518 = vmatprep.subr.bf16.mxu0 0
    %519 = vmatpush1.bf16.msra.mxu0 %v502
    %520 = vmatprep.subr.bf16.mxu0 0
    %521 = vmatpush1.bf16.msra.mxu0 %v503
    %522 = vmatprep.subr.bf16.mxu0 0
    %523 = vmatpush1.bf16.msra.mxu0 %v504
    %524 = vmatprep.subr.bf16.mxu0 0
    %525 = vmatpush1.bf16.msra.mxu0 %v505
    %526 = vmatprep.subr.bf16.mxu0 0
    %527 = vmatpush1.bf16.msra.mxu0 %v506
    %528 = vmatprep.subr.bf16.mxu0 0
    %529 = vmatpush1.bf16.msra.mxu0 %v507
    %530 = vmatprep.subr.bf16.mxu0 0
    %531 = vmatpush1.bf16.msra.mxu0 %v508
    %532 = vmatprep.subr.bf16.mxu0 0
    %533 = vmatpush1.bf16.msra.mxu0 %v509
    %534 = vmatprep.subr.bf16.mxu0 0
    %535 = vmatpush1.bf16.msra.mxu0 0
    %536 = vmatprep.subr.bf16.mxu0 0
    %537 = vmatpush1.bf16.msra.mxu0 0
    %538 = vmatprep.subr.bf16.mxu0 0
    %539 = vmatpush1.bf16.msra.mxu0 0
    %540 = vmatprep.subr.bf16.mxu0 0
    %541 = vmatpush1.bf16.msra.mxu0 0
    %542 = vmatprep.subr.bf16.mxu0 0
    %543 = vmatpush1.bf16.msra.mxu0 0
    %544 = vmatprep.subr.bf16.mxu0 0
    %545 = vmatpush1.bf16.msra.mxu0 0
    %546 = vmatprep.subr.bf16.mxu0 0
    %547 = vmatpush1.bf16.msra.mxu0 0
    %548 = vmatprep.subr.bf16.mxu0 0
    %549 = vmatpush1.bf16.msra.mxu0 0
    %550 = vmatprep.mubr.bf16.mxu0 0
    %551 = vmatmul.mubr.bf16.gmra.mrb[0].mxu0 %v446
    %v552 = vpop.f32.mrb[0].mxu0
    %v553 = vadd.f32 %v468, %v552
    %v554 = vpop.f32.mrb[0].mxu0
    %v555 = vpop.f32.mrb[0].mxu0
    %v556 = vadd.f32 %v468, %v555
    %v557 = vpop.f32.mrb[0].mxu0
    %558 = vdwg.mxu0
    %v559 = vmax.f32 %v553, 0.0
    %v560 = vmax.f32 %v556, 0.0
    %v561 = vpack.c.bf16 %v560, %v559
    %v562 = vld [vmem:[#allocation6] sm:$0xf]
    %v563 = vld [vmem:[#allocation6 + $0x4] sm:$0xf]
    %v564 = vld [vmem:[#allocation6 + $0x8] sm:$0xf]
    %v565 = vld [vmem:[#allocation6 + $0xc] sm:$0xf]
    %v566 = vld [vmem:[#allocation6 + $0x10] sm:$0xf]
    %v567 = vld [vmem:[#allocation6 + $0x14] sm:$0xf]
    %v568 = vld [vmem:[#allocation6 + $0x18] sm:$0xf]
    %v569 = vld [vmem:[#allocation6 + $0x1c] sm:$0xf]
    %v570 = vld [vmem:[#allocation6 + $0x20] sm:$0xf]
    %v571 = vld [vmem:[#allocation6 + $0x24] sm:$0xf]
    %v572 = vld [vmem:[#allocation6 + $0x28] sm:$0xf]
    %v573 = vld [vmem:[#allocation6 + $0x2c] sm:$0xf]
    %v574 = vld [vmem:[#allocation6 + $0x30] sm:$0xf]
    %v575 = vld [vmem:[#allocation6 + $0x34] sm:$0xf]
    %v576 = vld [vmem:[#allocation6 + $0x38] sm:$0xf]
    %v577 = vld [vmem:[#allocation6 + $0x3c] sm:$0xf]
    %v578 = vld [vmem:[#allocation7] sm:$0x1]
    %v580 = vlaneseq
    %v581 = vshrl.u32 %v580, 7
    %v582 = vsub.s32 0, %v581
    %v583 = vrot.slane %v578, %v582
    %v601 = vunpack.c.l.b16 %v562
    %v602 = vunpack.c.l.b16 %v563
    %v603 = vunpack.c.l.b16 %v564
    %v604 = vunpack.c.l.b16 %v565
    %v605 = vunpack.c.l.b16 %v566
    %v606 = vunpack.c.l.b16 %v567
    %v607 = vunpack.c.l.b16 %v568
    %v608 = vunpack.c.l.b16 %v569
    %v609 = vunpack.c.l.b16 %v570
    %v610 = vunpack.c.l.b16 %v571
    %v611 = vunpack.c.l.b16 %v572
    %v612 = vunpack.c.l.b16 %v573
    %v613 = vunpack.c.l.b16 %v574
    %v614 = vunpack.c.l.b16 %v575
    %v615 = vunpack.c.l.b16 %v576
    %v616 = vunpack.c.l.b16 %v577
    %v617 = vpack.c.b16 %v602, %v601
    %v618 = vpack.c.b16 %v604, %v603
    %v619 = vpack.c.b16 %v606, %v605
    %v620 = vpack.c.b16 %v608, %v607
    %v621 = vpack.c.b16 %v610, %v609
    %v622 = vpack.c.b16 %v612, %v611
    %v623 = vpack.c.b16 %v614, %v613
    %v624 = vpack.c.b16 %v616, %v615
    %633 = vmatprep.subr.bf16.mxu0 0
    %634 = vmatpush1.bf16.msra.mxu0 %v617
    %635 = vmatprep.subr.bf16.mxu0 0
    %636 = vmatpush1.bf16.msra.mxu0 %v618
    %637 = vmatprep.subr.bf16.mxu0 0
    %638 = vmatpush1.bf16.msra.mxu0 %v619
    %639 = vmatprep.subr.bf16.mxu0 0
    %640 = vmatpush1.bf16.msra.mxu0 %v620
    %641 = vmatprep.subr.bf16.mxu0 0
    %642 = vmatpush1.bf16.msra.mxu0 %v621
    %643 = vmatprep.subr.bf16.mxu0 0
    %644 = vmatpush1.bf16.msra.mxu0 %v622
    %645 = vmatprep.subr.bf16.mxu0 0
    %646 = vmatpush1.bf16.msra.mxu0 %v623
    %647 = vmatprep.subr.bf16.mxu0 0
    %648 = vmatpush1.bf16.msra.mxu0 %v624
    %649 = vmatprep.subr.bf16.mxu0 0
    %650 = vmatpush1.bf16.msra.mxu0 0
    %651 = vmatprep.subr.bf16.mxu0 0
    %652 = vmatpush1.bf16.msra.mxu0 0
    %653 = vmatprep.subr.bf16.mxu0 0
    %654 = vmatpush1.bf16.msra.mxu0 0
    %655 = vmatprep.subr.bf16.mxu0 0
    %656 = vmatpush1.bf16.msra.mxu0 0
    %657 = vmatprep.subr.bf16.mxu0 0
    %658 = vmatpush1.bf16.msra.mxu0 0
    %659 = vmatprep.subr.bf16.mxu0 0
    %660 = vmatpush1.bf16.msra.mxu0 0
    %661 = vmatprep.subr.bf16.mxu0 0
    %662 = vmatpush1.bf16.msra.mxu0 0
    %663 = vmatprep.subr.bf16.mxu0 0
    %664 = vmatpush1.bf16.msra.mxu0 0
    %665 = vmatprep.mubr.bf16.mxu0 0
    %666 = vmatmul.mubr.bf16.gmra.mrb[0].mxu0 %v561
    %v667 = vpop.f32.mrb[0].mxu0
    %v668 = vadd.f32 %v583, %v667
    %v669 = vpop.f32.mrb[0].mxu0
    %v670 = vpop.f32.mrb[0].mxu0
    %v671 = vadd.f32 %v583, %v670
    %v672 = vpop.f32.mrb[0].mxu0
    %673 = vdwg.mxu0
    %v674 = vpack.c.bf16 %v671, %v668
    %v676 = vunpack.c.l.b16 %v674
    %v677 = vunpack.c.h.b16 %v674
    %v678 = vpack.c.b16 %v676, %v676
    %v679 = vpack.c.b16 %v677, %v677
    %682 = vst [vmem:[%s9] sm:$0xf] %v678
    %683 = vst [vmem:[%s9 + $0x4] sm:$0xf] %v679
    // Predicated region
    $region54: #{ode_net_forward.1} parent=1 // pred_check
      _
    $region55: #{ode_net_forward.1} parent=1 // pred_check_branch
      %685 = sbr.rel (0) target = $region57
    $region56: #{ode_net_forward.1} parent=1 // pred_region
      _
    $region57: #{ode_net_forward.1} parent=1 // pred_fallthru
      _
    // Predicated region
    $region58: #{ode_net_forward.1} parent=1 // pred_check
      _
    $region59: #{ode_net_forward.1} parent=1 // pred_check_branch
      %687 = sbr.rel (0) target = $region61
    $region60: #{ode_net_forward.1} parent=1 // pred_region
      _
    $region61: #{ode_net_forward.1} parent=1 // pred_fallthru
      _
    %688 = vsyncpa [#allocation3], 1
    %689 = vsyncpa [#allocation5], 1
    %690 = vsyncpa [#allocation8], 1

</llo_original>
